<compile_context>
chip_gen: v6e
topology: v6e:2x2x1
jax: 0.10.0
libtpu: 0.0.40
codegen_flags: <defaults>
</compile_context>

<pallas_src>
import functools

import jax
import jax.numpy as jnp
from jax.experimental import pallas as pl
from jax.experimental.pallas import tpu as pltpu

INPUT_DIM = 30          # sklearn breast-cancer feature count
OUTPUT_DIM = 1
HIDDEN = (64, 32, 16, 8)
FOLD_DIM = 32           # hidden width at the ReLU after folding
DEFAULT_TILE_B = 8192   # batch rows per grid step (see VMEM sizing note above)
_SPLIT_THRESHOLD = 1024  # above this batch, use >=2 tiles so both TCs get work
_HIGHEST = jax.lax.Precision.HIGHEST


def _round_up(x, m):
    return ((x + m - 1) // m) * m


def _mlp_kernel(x_ref, wa_ref, ba_ref, wb_ref, bb_ref, o_ref):
    """One batch tile in natural (TB, INPUT_DIM) layout.

    x_ref : (TB, INPUT_DIM)          input rows (row-major HBM slab, one DMA)
    wa_ref: (INPUT_DIM, FOLD_DIM)    folded linear1@linear2
    ba_ref: (1, FOLD_DIM)            folded bias
    wb_ref: (FOLD_DIM, OUTPUT_DIM)   folded linear3@linear4@linear5
    bb_ref: (1, OUTPUT_DIM)          folded scalar bias
    o_ref : (TB, OUTPUT_DIM)         sigmoid output
    """
    # Folded linear1+linear2 on the MXU, f32 accumulation.
    h = jnp.dot(x_ref[...], wa_ref[...], preferred_element_type=jnp.float32)
    h = jnp.maximum(h + ba_ref[...], 0.0)                    # bias + ReLU (VPU)
    # Folded linear3+4+5: second MXU dot (keeps the 32-wide reduce off XLU/VALU).
    y = jnp.dot(h, wb_ref[...], preferred_element_type=jnp.float32) + bb_ref[...]
    # Exact sigmoid: exp on the EUP, exact f32 divide.  (For y << 0, exp(-y)
    # saturates to inf and 1/inf -> 0, which equals sigmoid(y) to f32 precision.)
    o_ref[...] = (1.0 / (1.0 + jnp.exp(-y))).astype(o_ref.dtype)


def _fold_params(params):
    """Fold the two purely-linear chains around the single ReLU (exact algebra)."""
    (w1, b1), (w2, b2), (w3, b3), (w4, b4), (w5, b5) = params
    wa = jnp.dot(w1, w2, precision=_HIGHEST)                          # (30, 32)
    ba = jnp.dot(b1, w2, precision=_HIGHEST) + b2                     # (1, 32)
    wb = jnp.dot(jnp.dot(w3, w4, precision=_HIGHEST), w5, precision=_HIGHEST)   # (32, 1)
    bb = jnp.dot(jnp.dot(b3, w4, precision=_HIGHEST) + b4, w5, precision=_HIGHEST) + b5
    return wa, ba, wb, bb


def _choose_tile(batch, tile_b):
    """Pick the batch tile (rows per grid step) and the grid size."""
    tile_b = max(8, _round_up(tile_b, 8))
    if batch >= 2 * tile_b:
        tb = tile_b                              # big batch: roofline-sized tiles
    elif batch > _SPLIT_THRESHOLD:
        tb = _round_up(pl.cdiv(batch, 2), 8)     # 2 tiles -> both TensorCores busy
    else:
        tb = batch                               # single full-extent block (always legal)
    return tb, pl.cdiv(batch, tb)


@functools.partial(jax.jit, static_argnames=("tile_b",))
def mlp_forward(x, params, *, tile_b=DEFAULT_TILE_B):
    """x: [B, INPUT_DIM] float32. params: list of (w, b), w [in,out], b [1,out]."""
    batch = x.shape[0]
    x = x.astype(jnp.float32)

    # Fold the linear chains around the single ReLU (computed once, outside kernel).
    wa, ba, wb, bb = _fold_params(params)
    wa = wa.astype(jnp.float32)
    ba = ba.astype(jnp.float32)
    wb = wb.astype(jnp.float32)
    bb = bb.astype(jnp.float32)

    tb, num_tiles = _choose_tile(batch, tile_b)

    cost = pl.CostEstimate(
        flops=2 * batch * (INPUT_DIM * FOLD_DIM + FOLD_DIM * OUTPUT_DIM),
        transcendentals=batch,                       # one exp per row
        bytes_accessed=(batch * INPUT_DIM * 4        # x read exactly once
                        + batch * OUTPUT_DIM * 4     # output
                        + (INPUT_DIM * FOLD_DIM + FOLD_DIM
                           + FOLD_DIM * OUTPUT_DIM + OUTPUT_DIM) * 4),
    )

    out = pl.pallas_call(
        _mlp_kernel,
        grid=(num_tiles,),
        in_specs=[
            pl.BlockSpec((tb, INPUT_DIM), lambda i: (i, 0)),            # x tile
            pl.BlockSpec((INPUT_DIM, FOLD_DIM), lambda i: (0, 0)),      # resident weights
            pl.BlockSpec((1, FOLD_DIM), lambda i: (0, 0)),
            pl.BlockSpec((FOLD_DIM, OUTPUT_DIM), lambda i: (0, 0)),
            pl.BlockSpec((1, OUTPUT_DIM), lambda i: (0, 0)),
        ],
        out_specs=pl.BlockSpec((tb, OUTPUT_DIM), lambda i: (i, 0)),
        out_shape=jax.ShapeDtypeStruct((batch, OUTPUT_DIM), jnp.float32),
        compiler_params=pltpu.CompilerParams(
            dimension_semantics=("parallel",),       # shard batch tiles over TCs
            vmem_limit_bytes=48 * 1024 * 1024,       # headroom within v7x's 64 MiB
        ),
        cost_estimate=cost,
    )(x, wa, ba, wb, bb)
    return out


def init_params(key):
    """Deterministic PyTorch-style (uniform +/- 1/sqrt(fan_in)) initialization."""
    dims = (INPUT_DIM,) + HIDDEN + (OUTPUT_DIM,)
    params = []
    for i in range(len(dims) - 1):
        fan_in, fan_out = dims[i], dims[i + 1]
        key, kw, kb = jax.random.split(key, 3)
        bound = 1.0 / jnp.sqrt(jnp.float32(fan_in))
        w = jax.random.uniform(kw, (fan_in, fan_out), jnp.float32, -bound, bound)
        b = jax.random.uniform(kb, (1, fan_out), jnp.float32, -bound, bound)
        params.append((w, b))
    return params


def reference_forward(x, params):
    """Unfused 5-layer reference matching the PyTorch forward."""
    h = x
    for i, (w, b) in enumerate(params):
        h = jnp.dot(h, w, precision=_HIGHEST) + b
        if i == 1:  # relu after linear2
            h = jnp.maximum(h, 0.0)
    return jax.nn.sigmoid(h)


def _check(out, ref, name):
    err = float(jnp.max(jnp.abs(out - ref)))
    assert jnp.allclose(out, ref, atol=2e-3, rtol=2e-3), f"{name}: max abs err {err}"


if __name__ == "__main__":
    key = jax.random.PRNGKey(0)
    kx1, kx2, kx3, kp = jax.random.split(key, 4)
    params = init_params(kp)

    # Tiny batch: single full-extent block.
    x_small = jax.random.normal(kx1, (8, INPUT_DIM), jnp.float32)
    out_small = jax.block_until_ready(mlp_forward(x_small, params))
    assert out_small.shape == (8, OUTPUT_DIM)
    _check(out_small, reference_forward(x_small, params), "small")

    # Breast-cancer-sized batch (569 rows), still a single block (non-multiple of 8).
    x_mid = jax.random.normal(kx2, (569, INPUT_DIM), jnp.float32)
    out_mid = jax.block_until_ready(mlp_forward(x_mid, params))
    assert out_mid.shape == (569, OUTPUT_DIM)
    _check(out_mid, reference_forward(x_mid, params), "mid")

    # Larger, non-multiple batch: 2-tile grid with a ragged (OOB-masked) last tile.
    x_big = jax.random.normal(kx3, (1061, INPUT_DIM), jnp.float32)
    out_big = jax.block_until_ready(mlp_forward(x_big, params))
    assert out_big.shape == (1061, OUTPUT_DIM)
    _check(out_big, reference_forward(x_big, params), "big")

    print("KERNEL_OK")
</pallas_src>

<mosaic_0001>
module attributes {stable_mosaic.version = 11 : i64} {
  func.func @_mlp_kernel(%arg0: i32, %arg1: memref<8x30xf32, #tpu.memory_space<vmem>>, %arg2: memref<30x32xf32, #tpu.memory_space<vmem>>, %arg3: memref<1x32xf32, #tpu.memory_space<vmem>>, %arg4: memref<32x1xf32, #tpu.memory_space<vmem>>, %arg5: memref<1x1xf32, #tpu.memory_space<vmem>>, %arg6: memref<8x1xf32, #tpu.memory_space<vmem>>) attributes {dimension_semantics = [#tpu.dimension_semantics<parallel>], iteration_bounds = array<i64: 1>, scalar_prefetch = 0 : i64, scratch_operands = 0 : i64, tpu.core_type = #tpu.core_type<tc>, window_params = [{transform_indices = @transform_0, window_bounds = array<i64: 8, 30>}, {pipeline_mode = #tpu.pipeline_mode<synchronous>, transform_indices = @transform_1, window_bounds = array<i64: 30, 32>}, {pipeline_mode = #tpu.pipeline_mode<synchronous>, transform_indices = @transform_2, window_bounds = array<i64: 1, 32>}, {pipeline_mode = #tpu.pipeline_mode<synchronous>, transform_indices = @transform_3, window_bounds = array<i64: 32, 1>}, {pipeline_mode = #tpu.pipeline_mode<synchronous>, transform_indices = @transform_4, window_bounds = array<i64: 1, 1>}, {transform_indices = @transform_5, window_bounds = array<i64: 8, 1>}]} {
    %c0 = arith.constant 0 : index
    %c0_0 = arith.constant 0 : index
    %0 = vector.load %arg1[%c0, %c0_0] : memref<8x30xf32, #tpu.memory_space<vmem>>, vector<8x30xf32>
    %c0_1 = arith.constant 0 : index
    %c0_2 = arith.constant 0 : index
    %1 = vector.load %arg2[%c0_1, %c0_2] : memref<30x32xf32, #tpu.memory_space<vmem>>, vector<30x32xf32>
    %cst = arith.constant dense<0.000000e+00> : vector<8x32xf32>
    %2 = tpu.matmul %0, %1, %cst {dimension_numbers = #tpu.dot_dimension_numbers<[1], [0], [0], [1], [0, 0, 1, 1], [], []>} : vector<8x30xf32>, vector<30x32xf32>, vector<8x32xf32> -> vector<8x32xf32>
    %c0_3 = arith.constant 0 : index
    %c0_4 = arith.constant 0 : index
    %3 = vector.load %arg3[%c0_3, %c0_4] : memref<1x32xf32, #tpu.memory_space<vmem>>, vector<1x32xf32>
    %4 = vector.broadcast %3 : vector<1x32xf32> to vector<8x32xf32>
    %5 = arith.addf %2, %4 : vector<8x32xf32>
    %cst_5 = arith.constant 0.000000e+00 : f32
    %6 = vector.broadcast %cst_5 : f32 to vector<8x32xf32>
    %7 = arith.maximumf %5, %6 : vector<8x32xf32>
    %c0_6 = arith.constant 0 : index
    %c0_7 = arith.constant 0 : index
    %8 = vector.load %arg4[%c0_6, %c0_7] : memref<32x1xf32, #tpu.memory_space<vmem>>, vector<32x1xf32>
    %cst_8 = arith.constant dense<0.000000e+00> : vector<8x1xf32>
    %9 = tpu.matmul %7, %8, %cst_8 {dimension_numbers = #tpu.dot_dimension_numbers<[1], [0], [0], [1], [0, 0, 1, 1], [], []>} : vector<8x32xf32>, vector<32x1xf32>, vector<8x1xf32> -> vector<8x1xf32>
    %c0_9 = arith.constant 0 : index
    %c0_10 = arith.constant 0 : index
    %10 = vector.load %arg5[%c0_9, %c0_10] : memref<1x1xf32, #tpu.memory_space<vmem>>, vector<1x1xf32>
    %11 = vector.broadcast %10 : vector<1x1xf32> to vector<8x1xf32>
    %12 = arith.addf %9, %11 : vector<8x1xf32>
    %cst_11 = arith.constant 0.000000e+00 : f32
    %13 = vector.broadcast %cst_11 : f32 to vector<8x1xf32>
    %14 = arith.subf %13, %12 : vector<8x1xf32>
    %15 = math.exp %14 : vector<8x1xf32>
    %cst_12 = arith.constant 1.000000e+00 : f32
    %16 = vector.broadcast %cst_12 : f32 to vector<8x1xf32>
    %17 = arith.addf %16, %15 : vector<8x1xf32>
    %cst_13 = arith.constant 1.000000e+00 : f32
    %18 = vector.broadcast %cst_13 : f32 to vector<8x1xf32>
    %19 = arith.divf %18, %17 : vector<8x1xf32>
    %c0_14 = arith.constant 0 : index
    %c0_15 = arith.constant 0 : index
    %20 = vector.load %arg6[%c0_14, %c0_15] : memref<8x1xf32, #tpu.memory_space<vmem>>, vector<8x1xf32>
    tpu.vector_store %arg6[%c0_14, %c0_15], %19 {strides = array<i32>} : memref<8x1xf32, #tpu.memory_space<vmem>>, vector<8x1xf32>,
    return
  }
  func.func @transform_0(%arg0: i32) -> (i32, i32) {
    %c0_i32 = arith.constant 0 : i32
    %c0_i32_0 = arith.constant 0 : i32
    return %arg0, %c0_i32 : i32, i32
  }
  func.func @transform_1(%arg0: i32) -> (i32, i32) {
    %c0_i32 = arith.constant 0 : i32
    %c0_i32_0 = arith.constant 0 : i32
    %c0_i32_1 = arith.constant 0 : i32
    return %c0_i32, %c0_i32_0 : i32, i32
  }
  func.func @transform_2(%arg0: i32) -> (i32, i32) {
    %c0_i32 = arith.constant 0 : i32
    %c0_i32_0 = arith.constant 0 : i32
    %c0_i32_1 = arith.constant 0 : i32
    return %c0_i32, %c0_i32_0 : i32, i32
  }
  func.func @transform_3(%arg0: i32) -> (i32, i32) {
    %c0_i32 = arith.constant 0 : i32
    %c0_i32_0 = arith.constant 0 : i32
    %c0_i32_1 = arith.constant 0 : i32
    return %c0_i32, %c0_i32_0 : i32, i32
  }
  func.func @transform_4(%arg0: i32) -> (i32, i32) {
    %c0_i32 = arith.constant 0 : i32
    %c0_i32_0 = arith.constant 0 : i32
    %c0_i32_1 = arith.constant 0 : i32
    return %c0_i32, %c0_i32_0 : i32, i32
  }
  func.func @transform_5(%arg0: i32) -> (i32, i32) {
    %c0_i32 = arith.constant 0 : i32
    %c0_i32_0 = arith.constant 0 : i32
    return %arg0, %c0_i32 : i32, i32
  }
}

</mosaic_0001>

<llo_original>
// kernel: mlp_forward.1
$region0: #{mlp_forward.1}
  #allocation0 [shape = 'u32[]', space=smem, size = 0x4, offset = 0x4, fixed_abs, tag = 'smem constant byte address 0x4 - core index']
  #allocation1 [shape = 'u32[144,128]{1,0:T(1,128)}', space=vmem, size = 0x12000, scoped, tag = 'internal scratch']
  #allocation2 [shape = 'f32[1,1]{1,0:T(1,128)S(1)}', space=vmem, size = 0x200, scoped, tag = 'scoped memory for mlp_forward.1']
  %s0 = inlined_call_operand.vmem [shape: f32[8,30], index: 0, kind: input, shape index: {}]
  %s1 = inlined_call_operand.vmem [shape: f32[30,32], index: 1, kind: input, shape index: {}]
  %s2 = inlined_call_operand.vmem [shape: f32[1,32], index: 2, kind: input, shape index: {}]
  %s3 = inlined_call_operand.vmem [shape: f32[32,1], index: 3, kind: input, shape index: {}]
  %s4 = inlined_call_operand.<no memory space> [shape: f32[1,1], index: 4, kind: input, shape index: {}]
  %s5 = inlined_call_operand.vmem [shape: f32[8,1], index: 5, kind: output, shape index: {}]
  %s6 = sld [smem:[#allocation0]]
  $region30: #{mlp_forward.1} parent=0
    _
  %s8 = ssub.s32 1, %s6
  %s9 = scalar_select 0, %s8, %s6
  %v10 = vstv %s4
  %11 = vst [vmem:[#allocation2] sm:$0x1] %v10
  // Predicated region
  $region2: #{mlp_forward.1} parent=0 // pred_check
    _
  $region3: #{mlp_forward.1} parent=0 // pred_check_branch
    %13 = sbr.rel (0) target = $region5
  $region4: #{mlp_forward.1} parent=0 // pred_region
    _
  $region5: #{mlp_forward.1} parent=0 // pred_fallthru
    _
  // Predicated region
  $region6: #{mlp_forward.1} parent=0 // pred_check
    _
  $region7: #{mlp_forward.1} parent=0 // pred_check_branch
    %15 = sbr.rel (0) target = $region9
  $region8: #{mlp_forward.1} parent=0 // pred_region
    _
  $region9: #{mlp_forward.1} parent=0 // pred_fallthru
    _
  // Predicated region
  $region10: #{mlp_forward.1} parent=0 // pred_check
    _
  $region11: #{mlp_forward.1} parent=0 // pred_check_branch
    %17 = sbr.rel (0) target = $region13
  $region12: #{mlp_forward.1} parent=0 // pred_region
    _
  $region13: #{mlp_forward.1} parent=0 // pred_fallthru
    _
  // Predicated region
  $region14: #{mlp_forward.1} parent=0 // pred_check
    _
  $region15: #{mlp_forward.1} parent=0 // pred_check_branch
    %19 = sbr.rel (0) target = $region17
  $region16: #{mlp_forward.1} parent=0 // pred_region
    _
  $region17: #{mlp_forward.1} parent=0 // pred_fallthru
    _
  // Predicated region
  $region18: #{mlp_forward.1} parent=0 // pred_check
    _
  $region19: #{mlp_forward.1} parent=0 // pred_check_branch
    %21 = sbr.rel (0) target = $region21
  $region20: #{mlp_forward.1} parent=0 // pred_region
    _
  $region21: #{mlp_forward.1} parent=0 // pred_fallthru
    _
  %v22 = vld [vmem:[%s0] sm:$0xff]
  %v23 = vld [vmem:[%s1] sm:$0xff]
  %v24 = vld [vmem:[%s1 + $0x8] sm:$0xff]
  %v25 = vld [vmem:[%s1 + $0x10] sm:$0xff]
  %v26 = vld [vmem:[%s1 + $0x18] sm:$0x3f]
  %v27 = vld [vmem:[%s2] sm:$0x1]
  %v29 = vlaneseq
  %v30 = vshrl.u32 %v29, 7
  %v31 = vsub.s32 0, %v30
  %v32 = vrot.slane %v27, %v31
  %vm34 = vcmask 244736
  %v36 = vsel %vm34, %v22, 0
  %vm38 = vcmask 1045504
  %v40 = vsel %vm38, %v26, 0
  %42 = vmatprep.subr.mxu0 0.0
  %43 = vmatpush1.msra.mxu0 0.0
  %44 = vmatprep.subr.mxu0 0.0
  %45 = vmatpush1.msra.mxu0 0.0
  %46 = vmatprep.subr.mxu0 0.0
  %47 = vmatpush1.msra.mxu0 0.0
  %48 = vmatprep.subr.mxu0 0.0
  %49 = vmatpush1.msra.mxu0 0.0
  %50 = vmatprep.subr.mxu0 0.0
  %51 = vmatpush1.msra.mxu0 0.0
  %52 = vmatprep.subr.mxu0 0.0
  %53 = vmatpush1.msra.mxu0 0.0
  %54 = vmatprep.subr.mxu0 0.0
  %55 = vmatpush1.msra.mxu0 0.0
  %56 = vmatprep.subr.mxu0 0.0
  %57 = vmatpush1.msra.mxu0 0.0
  %58 = vmatprep.subr.mxu0 0.0
  %59 = vmatpush1.msra.mxu0 0.0
  %60 = vmatprep.subr.mxu0 0.0
  %61 = vmatpush1.msra.mxu0 0.0
  %62 = vmatprep.subr.mxu0 0.0
  %63 = vmatpush1.msra.mxu0 0.0
  %64 = vmatprep.subr.mxu0 0.0
  %65 = vmatpush1.msra.mxu0 0.0
  %66 = vmatprep.subr.mxu0 0.0
  %67 = vmatpush1.msra.mxu0 %v40
  %68 = vmatprep.subr.mxu0 0.0
  %69 = vmatpush1.msra.mxu0 %v25
  %70 = vmatprep.subr.mxu0 0.0
  %71 = vmatpush1.msra.mxu0 %v24
  %72 = vmatprep.subr.mxu0 0.0
  %73 = vmatpush1.msra.mxu0 %v23
  %74 = vmatprep.subr.mxu0 0.0
  %75 = vmatpush2.msra.mxu0 0.0
  %76 = vmatprep.subr.mxu0 0.0
  %77 = vmatpush2.msra.mxu0 0.0
  %78 = vmatprep.subr.mxu0 0.0
  %79 = vmatpush2.msra.mxu0 0.0
  %80 = vmatprep.subr.mxu0 0.0
  %81 = vmatpush2.msra.mxu0 0.0
  %82 = vmatprep.subr.mxu0 0.0
  %83 = vmatpush2.msra.mxu0 0.0
  %84 = vmatprep.subr.mxu0 0.0
  %85 = vmatpush2.msra.mxu0 0.0
  %86 = vmatprep.subr.mxu0 0.0
  %87 = vmatpush2.msra.mxu0 0.0
  %88 = vmatprep.subr.mxu0 0.0
  %89 = vmatpush2.msra.mxu0 0.0
  %90 = vmatprep.subr.mxu0 0.0
  %91 = vmatpush2.msra.mxu0 0.0
  %92 = vmatprep.subr.mxu0 0.0
  %93 = vmatpush2.msra.mxu0 0.0
  %94 = vmatprep.subr.mxu0 0.0
  %95 = vmatpush2.msra.mxu0 0.0
  %96 = vmatprep.subr.mxu0 0.0
  %97 = vmatpush2.msra.mxu0 0.0
  %98 = vmatprep.subr.mxu0 0.0
  %99 = vmatpush2.msra.mxu0 0.0
  %100 = vmatprep.subr.mxu0 0.0
  %101 = vmatpush2.msra.mxu0 0.0
  %102 = vmatprep.subr.mxu0 0.0
  %103 = vmatpush2.msra.mxu0 0.0
  %104 = vmatprep.subr.mxu0 0.0
  %105 = vmatpush2.msra.mxu0 0.0
  %106 = vmatprep.mubr.f32.mxu0 0.0
  %107 = vmatmul.mubr.f32.gmra.mxu0 %v36
  %v108 = vpop.f32.mrf.mxu0
  %v109 = vadd.f32 %v32, %v108
  %v110 = vpop.f32.mrf.mxu0
  %111 = vdwg.mxu0
  %v112 = vmax.f32 %v109, 0.0
  %v113 = vld [vmem:[%s3] sm:$0xff]
  %v114 = vld [vmem:[%s3 + $0x8] sm:$0xff]
  %v115 = vld [vmem:[%s3 + $0x10] sm:$0xff]
  %v116 = vld [vmem:[%s3 + $0x18] sm:$0xff]
  %v117 = vld [vmem:[#allocation2] sm:$0x1]
  %v119 = vlaneseq
  %v120 = vshrl.u32 %v119, 7
  %v121 = vsub.s32 0, %v120
  %v122 = vrot.slane %v117, %v121
  %vm124 = vcmask 261120
  %v126 = vsel %vm124, %v112, 0
  %128 = vmatprep.subr.mxu0 0.0
  %129 = vmatpush1.msra.mxu0 0.0
  %130 = vmatprep.subr.mxu0 0.0
  %131 = vmatpush1.msra.mxu0 0.0
  %132 = vmatprep.subr.mxu0 0.0
  %133 = vmatpush1.msra.mxu0 0.0
  %134 = vmatprep.subr.mxu0 0.0
  %135 = vmatpush1.msra.mxu0 0.0
  %136 = vmatprep.subr.mxu0 0.0
  %137 = vmatpush1.msra.mxu0 0.0
  %138 = vmatprep.subr.mxu0 0.0
  %139 = vmatpush1.msra.mxu0 0.0
  %140 = vmatprep.subr.mxu0 0.0
  %141 = vmatpush1.msra.mxu0 0.0
  %142 = vmatprep.subr.mxu0 0.0
  %143 = vmatpush1.msra.mxu0 0.0
  %144 = vmatprep.subr.mxu0 0.0
  %145 = vmatpush1.msra.mxu0 0.0
  %146 = vmatprep.subr.mxu0 0.0
  %147 = vmatpush1.msra.mxu0 0.0
  %148 = vmatprep.subr.mxu0 0.0
  %149 = vmatpush1.msra.mxu0 0.0
  %150 = vmatprep.subr.mxu0 0.0
  %151 = vmatpush1.msra.mxu0 0.0
  %152 = vmatprep.subr.mxu0 0.0
  %153 = vmatpush1.msra.mxu0 %v116
  %154 = vmatprep.subr.mxu0 0.0
  %155 = vmatpush1.msra.mxu0 %v115
  %156 = vmatprep.subr.mxu0 0.0
  %157 = vmatpush1.msra.mxu0 %v114
  %158 = vmatprep.subr.mxu0 0.0
  %159 = vmatpush1.msra.mxu0 %v113
  %160 = vmatprep.subr.mxu0 0.0
  %161 = vmatpush2.msra.mxu0 0.0
  %162 = vmatprep.subr.mxu0 0.0
  %163 = vmatpush2.msra.mxu0 0.0
  %164 = vmatprep.subr.mxu0 0.0
  %165 = vmatpush2.msra.mxu0 0.0
  %166 = vmatprep.subr.mxu0 0.0
  %167 = vmatpush2.msra.mxu0 0.0
  %168 = vmatprep.subr.mxu0 0.0
  %169 = vmatpush2.msra.mxu0 0.0
  %170 = vmatprep.subr.mxu0 0.0
  %171 = vmatpush2.msra.mxu0 0.0
  %172 = vmatprep.subr.mxu0 0.0
  %173 = vmatpush2.msra.mxu0 0.0
  %174 = vmatprep.subr.mxu0 0.0
  %175 = vmatpush2.msra.mxu0 0.0
  %176 = vmatprep.subr.mxu0 0.0
  %177 = vmatpush2.msra.mxu0 0.0
  %178 = vmatprep.subr.mxu0 0.0
  %179 = vmatpush2.msra.mxu0 0.0
  %180 = vmatprep.subr.mxu0 0.0
  %181 = vmatpush2.msra.mxu0 0.0
  %182 = vmatprep.subr.mxu0 0.0
  %183 = vmatpush2.msra.mxu0 0.0
  %184 = vmatprep.subr.mxu0 0.0
  %185 = vmatpush2.msra.mxu0 0.0
  %186 = vmatprep.subr.mxu0 0.0
  %187 = vmatpush2.msra.mxu0 0.0
  %188 = vmatprep.subr.mxu0 0.0
  %189 = vmatpush2.msra.mxu0 0.0
  %190 = vmatprep.subr.mxu0 0.0
  %191 = vmatpush2.msra.mxu0 0.0
  %192 = vmatprep.mubr.f32.mxu0 0.0
  %193 = vmatmul.mubr.f32.gmra.mxu0 %v126
  %v194 = vpop.f32.mrf.mxu0
  %v195 = vadd.f32 %v122, %v194
  %v196 = vpop.f32.mrf.mxu0
  %197 = vdwg.mxu0
  %v198 = vsub.f32 0.0, %v195
  %v199 = vmul.f32 %v198, 1.442695
  %v200 = vpow.pop %v199
  %v201 = vadd.f32 %v200, 1.0
  %v202 = vrcp.pop %v201
  %v203 = vmul.f32 1.0, %v202
  %vm204 = vcmask 7168
  %205 = vst.msk [vmem:[%s5] sm:$0xff] %vm204, %v203
  // Predicated region
  $region22: #{mlp_forward.1} parent=0 // pred_check
    _
  $region23: #{mlp_forward.1} parent=0 // pred_check_branch
    %207 = sbr.rel (0) target = $region25
  $region24: #{mlp_forward.1} parent=0 // pred_region
    _
  $region25: #{mlp_forward.1} parent=0 // pred_fallthru
    _
  // Predicated region
  $region26: #{mlp_forward.1} parent=0 // pred_check
    _
  $region27: #{mlp_forward.1} parent=0 // pred_check_branch
    %209 = sbr.rel (0) target = $region29
  $region28: #{mlp_forward.1} parent=0 // pred_region
    _
  $region29: #{mlp_forward.1} parent=0 // pred_fallthru
    _

</llo_original>
